<compile_context>
chip_gen: v6e
topology: v6e:2x2x1
jax: 0.10.0
libtpu: 0.0.40
codegen_flags: <defaults>
</compile_context>

<pallas_src>
import jax
import jax.numpy as jnp
from jax.experimental import pallas as pl
from jax.experimental.pallas import tpu as pltpu


def _round_up(x: int, m: int) -> int:
    return ((x + m - 1) // m) * m


def _vmem_capacity_bytes() -> int:
    try:
        return int(pltpu.get_tpu_info().vmem_capacity_bytes)
    except Exception:
        return 64 << 20  # conservative fallback (v7x per-TC physical VMEM)


def _pick_tile_atoms(n_atoms, d_in, d_out_p, x_bytes, y_bytes, w_bytes, b_bytes):
    """Largest atom tile keeping double-buffered tiles within ~1/4 of VMEM."""
    vmem_cap = _vmem_capacity_bytes()
    resident = d_in * d_out_p * w_bytes + d_out_p * b_bytes  # single-buffered W, b
    budget = vmem_cap // 4 - resident
    per_atom = 2 * (d_in * x_bytes + d_out_p * y_bytes)      # 2x: double-buffered
    tile = budget // max(per_atom, 1)
    tile = max(8, min(int(tile), 2048))                      # 512-2048 sweet spot
    tile = (tile // 8) * 8                                   # sublane multiple
    n_pad8 = _round_up(n_atoms, 8)
    if n_pad8 <= tile:                                       # fits one block
        return n_pad8
    return tile


def _atomwise_linear_kernel(x_ref, w_ref, b_ref, o_ref):
    # Per-atom affine transform: bf16 operands, f32 accumulate on the MXU,
    # f32 bias-add epilogue, cast once on store.
    acc = jnp.dot(x_ref[...], w_ref[...], preferred_element_type=jnp.float32)
    o_ref[...] = (acc + b_ref[...]).astype(o_ref.dtype)


def atomwise_linear(x, w, b, *, tile_atoms=None, compute_dtype=jnp.bfloat16,
                    out_dtype=None):
    """y = x @ w + b applied independently to every atom row.

    x: [N, d_in], w: [d_in, d_out], b: [1, d_out].  x / w are stored as
    `compute_dtype` (bf16) on the HBM side, accumulation is f32, the result
    is returned as `out_dtype` (defaults to x.dtype).
    """
    n_atoms, d_in = x.shape
    d_in_w, d_out = w.shape
    assert d_in == d_in_w, "weight must be [d_in, d_out]"
    out_dtype = x.dtype if out_dtype is None else out_dtype

    # Lane-dense output: pad d_out to a multiple of 128 (weight/bias only).
    d_out_p = _round_up(d_out, 128)
    if d_out_p != d_out:
        w = jnp.pad(w, ((0, 0), (0, d_out_p - d_out)))
        b = jnp.pad(b, ((0, 0), (0, d_out_p - d_out)))

    # Narrow the HBM-resident activations/weights; keep bias in f32.
    x_c = x.astype(compute_dtype)
    w_c = w.astype(compute_dtype)
    b_c = b.astype(jnp.float32)

    x_bytes = jnp.dtype(compute_dtype).itemsize
    y_bytes = jnp.dtype(out_dtype).itemsize
    w_bytes = x_bytes
    b_bytes = 4

    if tile_atoms is None:
        tile_atoms = _pick_tile_atoms(n_atoms, d_in, d_out_p,
                                      x_bytes, y_bytes, w_bytes, b_bytes)
    tile_atoms = max(8, (int(tile_atoms) // 8) * 8)

    # Pad the atom axis once so every block is full (no ragged last tile).
    n_padded = _round_up(n_atoms, tile_atoms)
    if n_padded != n_atoms:
        x_c = jnp.pad(x_c, ((0, n_padded - n_atoms), (0, 0)))

    grid = (n_padded // tile_atoms,)

    # Explicit VMEM scoped limit: actual footprint x2 headroom, clamped to a
    # safe fraction of physical VMEM for the current generation.
    vmem_cap = _vmem_capacity_bytes()
    tile_bytes = 2 * tile_atoms * (d_in * x_bytes + d_out_p * y_bytes)
    resident_bytes = d_in * d_out_p * w_bytes + d_out_p * b_bytes
    vmem_limit = int(min(max(2 * (tile_bytes + resident_bytes), 32 << 20),
                         vmem_cap * 3 // 4))

    cost = pl.CostEstimate(
        flops=2 * n_padded * d_in * d_out_p,
        transcendentals=0,
        bytes_accessed=(n_padded * d_in * x_bytes
                        + n_padded * d_out_p * y_bytes
                        + d_in * d_out_p * w_bytes
                        + d_out_p * b_bytes),
    )

    def _run(param_pipeline_mode):
        extra = ({} if param_pipeline_mode is None
                 else dict(pipeline_mode=param_pipeline_mode))
        grid_spec = pltpu.PrefetchScalarGridSpec(
            num_scalar_prefetch=0,
            grid=grid,
            in_specs=[
                # one tile of atoms per grid step (double-buffered by default)
                pl.BlockSpec((tile_atoms, d_in), lambda i: (i, 0)),
                # weight / bias: constant index_map -> fetched once
                pl.BlockSpec((d_in, d_out_p), lambda i: (0, 0), **extra),
                pl.BlockSpec((1, d_out_p), lambda i: (0, 0), **extra),
            ],
            out_specs=pl.BlockSpec((tile_atoms, d_out_p), lambda i: (i, 0)),
        )
        return pl.pallas_call(
            _atomwise_linear_kernel,
            out_shape=jax.ShapeDtypeStruct((n_padded, d_out_p), out_dtype),
            grid_spec=grid_spec,
            compiler_params=pltpu.CompilerParams(
                dimension_semantics=("parallel",),  # v7x: shard atoms over 2 TCs
                vmem_limit_bytes=vmem_limit,
            ),
            cost_estimate=cost,
        )(x_c, w_c, b_c)

    try:
        # Single-buffer the constant weight/bias blocks to save VMEM.
        y = _run(pl.Buffered(1))
    except Exception:
        # Fallback if this Pallas build rejects buffer_count=1.
        y = _run(None)

    # Strip padding back off.
    if n_padded != n_atoms or d_out_p != d_out:
        y = y[:n_atoms, :d_out]
    return y


class AtomwiseOperation:
    """JAX/Pallas port of nequip.nn.AtomwiseOperation.

    forward() mirrors the PyTorch semantics exactly: it replaces data[field]
    with operation(data[field]) and returns the (same) dict.  `operation` is
    realized as the canonical NequIP per-atom (irreps-wise) linear map whose
    matmul runs in the Pallas kernel above.
    """

    def __init__(self, field: str, d_in: int, d_out: int, key,
                 compute_dtype=jnp.bfloat16):
        self.field = field
        self.compute_dtype = compute_dtype
        k_w, k_b = jax.random.split(key)
        # Deterministic synthetic parameters (no checkpoint loading).
        scale = 1.0 / jnp.sqrt(jnp.float32(d_in))
        self.weight = jax.random.normal(k_w, (d_in, d_out), jnp.float32) * scale
        self.bias = jax.random.normal(k_b, (1, d_out), jnp.float32) * 0.01
        # TODO(synk): irreps bookkeeping (_init_irreps) is metadata-only and has
        # no runtime compute; it is not reproduced here.

    def __call__(self, data: dict) -> dict:
        data[self.field] = atomwise_linear(
            data[self.field], self.weight, self.bias,
            compute_dtype=self.compute_dtype)
        return data


if __name__ == "__main__":
    key = jax.random.PRNGKey(0)
    k_x, k_params = jax.random.split(key)

    # Small shapes; the ragged atom count and non-128-multiple d_out exercise
    # the wrapper's padding / lane-densification paths.
    n_atoms, d_in, d_out = 250, 64, 96
    x = jax.random.normal(k_x, (n_atoms, d_in), jnp.float32)

    module = AtomwiseOperation(field="node_features", d_in=d_in, d_out=d_out,
                               key=k_params)

    data = {"node_features": x, "pos": jnp.zeros((n_atoms, 3), jnp.float32)}
    out = module(data)
    y = jax.block_until_ready(out["node_features"])

    # Reference mirrors the bf16 storage of x / W (f32 accumulate).
    x_bf = x.astype(jnp.bfloat16).astype(jnp.float32)
    w_bf = module.weight.astype(jnp.bfloat16).astype(jnp.float32)
    y_ref = x_bf @ w_bf + module.bias

    assert y.shape == (n_atoms, d_out)
    assert jnp.allclose(y, y_ref, atol=5e-3, rtol=5e-3)

    # Also exercise the multi-block (grid > 1) pipelined path explicitly.
    y2 = jax.block_until_ready(
        atomwise_linear(x, module.weight, module.bias, tile_atoms=64))
    assert jnp.allclose(y2, y_ref, atol=5e-3, rtol=5e-3)

    print("KERNEL_OK")
</pallas_src>

<mosaic_0001>
module attributes {stable_mosaic.version = 11 : i64} {
  func.func @_atomwise_linear_kernel(%arg0: i32, %arg1: memref<256x64xbf16, #tpu.memory_space<vmem>>, %arg2: memref<64x128xbf16, #tpu.memory_space<vmem>>, %arg3: memref<1x128xf32, #tpu.memory_space<vmem>>, %arg4: memref<256x128xf32, #tpu.memory_space<vmem>>) attributes {dimension_semantics = [#tpu.dimension_semantics<parallel>], iteration_bounds = array<i64: 1>, scalar_prefetch = 0 : i64, scratch_operands = 0 : i64, tpu.core_type = #tpu.core_type<tc>, window_params = [{transform_indices = @transform_0, window_bounds = array<i64: 256, 64>}, {pipeline_mode = #tpu.pipeline_mode<synchronous>, transform_indices = @transform_1, window_bounds = array<i64: 64, 128>}, {pipeline_mode = #tpu.pipeline_mode<synchronous>, transform_indices = @transform_2, window_bounds = array<i64: 1, 128>}, {transform_indices = @transform_3, window_bounds = array<i64: 256, 128>}]} {
    %c0 = arith.constant 0 : index
    %c0_0 = arith.constant 0 : index
    %0 = vector.load %arg1[%c0, %c0_0] : memref<256x64xbf16, #tpu.memory_space<vmem>>, vector<256x64xbf16>
    %c0_1 = arith.constant 0 : index
    %c0_2 = arith.constant 0 : index
    %1 = vector.load %arg2[%c0_1, %c0_2] : memref<64x128xbf16, #tpu.memory_space<vmem>>, vector<64x128xbf16>
    %cst = arith.constant dense<0.000000e+00> : vector<256x128xf32>
    %2 = tpu.matmul %0, %1, %cst {dimension_numbers = #tpu.dot_dimension_numbers<[1], [0], [0], [1], [0, 0, 1, 1], [], []>} : vector<256x64xbf16>, vector<64x128xbf16>, vector<256x128xf32> -> vector<256x128xf32>
    %c0_3 = arith.constant 0 : index
    %c0_4 = arith.constant 0 : index
    %3 = vector.load %arg3[%c0_3, %c0_4] : memref<1x128xf32, #tpu.memory_space<vmem>>, vector<1x128xf32>
    %4 = vector.broadcast %3 : vector<1x128xf32> to vector<256x128xf32>
    %5 = arith.addf %2, %4 : vector<256x128xf32>
    %c0_5 = arith.constant 0 : index
    %c0_6 = arith.constant 0 : index
    %6 = vector.load %arg4[%c0_5, %c0_6] : memref<256x128xf32, #tpu.memory_space<vmem>>, vector<256x128xf32>
    tpu.vector_store %arg4[%c0_5, %c0_6], %5 {strides = array<i32>} : memref<256x128xf32, #tpu.memory_space<vmem>>, vector<256x128xf32>,
    return
  }
  func.func @transform_0(%arg0: i32) -> (i32, i32) {
    %c0_i32 = arith.constant 0 : i32
    %c0_i32_0 = arith.constant 0 : i32
    return %arg0, %c0_i32 : i32, i32
  }
  func.func @transform_1(%arg0: i32) -> (i32, i32) {
    %c0_i32 = arith.constant 0 : i32
    %c0_i32_0 = arith.constant 0 : i32
    %c0_i32_1 = arith.constant 0 : i32
    return %c0_i32, %c0_i32_0 : i32, i32
  }
  func.func @transform_2(%arg0: i32) -> (i32, i32) {
    %c0_i32 = arith.constant 0 : i32
    %c0_i32_0 = arith.constant 0 : i32
    %c0_i32_1 = arith.constant 0 : i32
    return %c0_i32, %c0_i32_0 : i32, i32
  }
  func.func @transform_3(%arg0: i32) -> (i32, i32) {
    %c0_i32 = arith.constant 0 : i32
    %c0_i32_0 = arith.constant 0 : i32
    return %arg0, %c0_i32 : i32, i32
  }
}

module attributes {stable_mosaic.version = 11 : i64} {
  func.func @_atomwise_linear_kernel(%arg0: i32, %arg1: memref<256x64xbf16, #tpu.memory_space<vmem>>, %arg2: memref<64x128xbf16, #tpu.memory_space<vmem>>, %arg3: memref<1x128xf32, #tpu.memory_space<vmem>>, %arg4: memref<256x128xf32, #tpu.memory_space<vmem>>) attributes {dimension_semantics = [#tpu.dimension_semantics<parallel>], iteration_bounds = array<i64: 1>, scalar_prefetch = 0 : i64, scratch_operands = 0 : i64, tpu.core_type = #tpu.core_type<tc>, window_params = [{transform_indices = @transform_0, window_bounds = array<i64: 256, 64>}, {pipeline_mode = #tpu.pipeline_mode<synchronous>, transform_indices = @transform_1, window_bounds = array<i64: 64, 128>}, {pipeline_mode = #tpu.pipeline_mode<synchronous>, transform_indices = @transform_2, window_bounds = array<i64: 1, 128>}, {transform_indices = @transform_3, window_bounds = array<i64: 256, 128>}]} {
    %c0 = arith.constant 0 : index
    %c0_0 = arith.constant 0 : index
    %0 = vector.load %arg1[%c0, %c0_0] : memref<256x64xbf16, #tpu.memory_space<vmem>>, vector<256x64xbf16>
    %c0_1 = arith.constant 0 : index
    %c0_2 = arith.constant 0 : index
    %1 = vector.load %arg2[%c0_1, %c0_2] : memref<64x128xbf16, #tpu.memory_space<vmem>>, vector<64x128xbf16>
    %cst = arith.constant dense<0.000000e+00> : vector<256x128xf32>
    %2 = tpu.matmul %0, %1, %cst {dimension_numbers = #tpu.dot_dimension_numbers<[1], [0], [0], [1], [0, 0, 1, 1], [], []>} : vector<256x64xbf16>, vector<64x128xbf16>, vector<256x128xf32> -> vector<256x128xf32>
    %c0_3 = arith.constant 0 : index
    %c0_4 = arith.constant 0 : index
    %3 = vector.load %arg3[%c0_3, %c0_4] : memref<1x128xf32, #tpu.memory_space<vmem>>, vector<1x128xf32>
    %4 = vector.broadcast %3 : vector<1x128xf32> to vector<256x128xf32>
    %5 = arith.addf %2, %4 : vector<256x128xf32>
    %c0_5 = arith.constant 0 : index
    %c0_6 = arith.constant 0 : index
    %6 = vector.load %arg4[%c0_5, %c0_6] : memref<256x128xf32, #tpu.memory_space<vmem>>, vector<256x128xf32>
    tpu.vector_store %arg4[%c0_5, %c0_6], %5 {strides = array<i32>} : memref<256x128xf32, #tpu.memory_space<vmem>>, vector<256x128xf32>,
    return
  }
  func.func @transform_0(%arg0: i32) -> (i32, i32) {
    %c0_i32 = arith.constant 0 : i32
    %c0_i32_0 = arith.constant 0 : i32
    return %arg0, %c0_i32 : i32, i32
  }
  func.func @transform_1(%arg0: i32) -> (i32, i32) {
    %c0_i32 = arith.constant 0 : i32
    %c0_i32_0 = arith.constant 0 : i32
    %c0_i32_1 = arith.constant 0 : i32
    return %c0_i32, %c0_i32_0 : i32, i32
  }
  func.func @transform_2(%arg0: i32) -> (i32, i32) {
    %c0_i32 = arith.constant 0 : i32
    %c0_i32_0 = arith.constant 0 : i32
    %c0_i32_1 = arith.constant 0 : i32
    return %c0_i32, %c0_i32_0 : i32, i32
  }
  func.func @transform_3(%arg0: i32) -> (i32, i32) {
    %c0_i32 = arith.constant 0 : i32
    %c0_i32_0 = arith.constant 0 : i32
    return %arg0, %c0_i32 : i32, i32
  }
}

</mosaic_0001>

<llo_original>
// kernel: tpu_custom_call.1
$region0: #{tpu_custom_call.1}
  #allocation0 [shape = 'u32[]', space=smem, size = 0x4, offset = 0x4, fixed_abs, tag = 'smem constant byte address 0x4 - core index']
  #allocation1 [shape = 'u32[144,128]{1,0:T(1,128)}', space=vmem, size = 0x12000, scoped, tag = 'internal scratch']
  %s0 = inlined_call_operand.vmem [shape: bf16[256,64], index: 0, kind: input, shape index: {}]
  %s1 = inlined_call_operand.vmem [shape: bf16[64,128], index: 1, kind: input, shape index: {}]
  %s2 = inlined_call_operand.vmem [shape: f32[1,128], index: 2, kind: input, shape index: {}]
  %s3 = inlined_call_operand.hbm [shape: f32[256,128], index: 3, kind: output, shape index: {}]
  %s4 = sld [smem:[#allocation0]]
  $region22: #{tpu_custom_call.1} parent=0
    _
  %s6 = ssub.s32 1, %s4
  %s7 = scalar_select 0, %s6, %s4
  $region1: #{tpu_custom_call.1} parent=0
    #allocation2 [shape = 'u8[131072]{0}', space=vmem, size = 0x20000, scoped, tag = 'output window, operand 0, single buffered']
    #allocation3 [shape = 's32[1]{0}', space=sflag, size = 0x4, scoped, tag = 'scoped memory for tpu_custom_call.1']
    %8 = vsyncpa [#allocation3], 0
    // Predicated region
    $region2: #{tpu_custom_call.1} parent=1 // pred_check
      _
    $region3: #{tpu_custom_call.1} parent=1 // pred_check_branch
      %10 = sbr.rel (0) target = $region5
    $region4: #{tpu_custom_call.1} parent=1 // pred_region
      _
    $region5: #{tpu_custom_call.1} parent=1 // pred_fallthru
      _
    // Predicated region
    $region6: #{tpu_custom_call.1} parent=1 // pred_check
      _
    $region7: #{tpu_custom_call.1} parent=1 // pred_check_branch
      %12 = sbr.rel (0) target = $region9
    $region8: #{tpu_custom_call.1} parent=1 // pred_region
      _
    $region9: #{tpu_custom_call.1} parent=1 // pred_fallthru
      _
    // Predicated region
    $region10: #{tpu_custom_call.1} parent=1 // pred_check
      _
    $region11: #{tpu_custom_call.1} parent=1 // pred_check_branch
      %14 = sbr.rel (0) target = $region13
    $region12: #{tpu_custom_call.1} parent=1 // pred_region
      _
    $region13: #{tpu_custom_call.1} parent=1 // pred_fallthru
      _
    %v16 = vld [vmem:[%s0] sm:$0xf]
    %v17 = vld [vmem:[%s0 + $0x4] sm:$0xf]
    %v18 = vld [vmem:[%s0 + $0x8] sm:$0xf]
    %v19 = vld [vmem:[%s0 + $0xc] sm:$0xf]
    %v20 = vld [vmem:[%s0 + $0x10] sm:$0xf]
    %v21 = vld [vmem:[%s0 + $0x14] sm:$0xf]
    %v22 = vld [vmem:[%s0 + $0x18] sm:$0xf]
    %v23 = vld [vmem:[%s0 + $0x1c] sm:$0xf]
    %v24 = vld [vmem:[%s0 + $0x20] sm:$0xf]
    %v25 = vld [vmem:[%s0 + $0x24] sm:$0xf]
    %v26 = vld [vmem:[%s0 + $0x28] sm:$0xf]
    %v27 = vld [vmem:[%s0 + $0x2c] sm:$0xf]
    %v28 = vld [vmem:[%s0 + $0x30] sm:$0xf]
    %v29 = vld [vmem:[%s0 + $0x34] sm:$0xf]
    %v30 = vld [vmem:[%s0 + $0x38] sm:$0xf]
    %v31 = vld [vmem:[%s0 + $0x3c] sm:$0xf]
    %v32 = vld [vmem:[%s0 + $0x40] sm:$0xf]
    %v33 = vld [vmem:[%s0 + $0x44] sm:$0xf]
    %v34 = vld [vmem:[%s0 + $0x48] sm:$0xf]
    %v35 = vld [vmem:[%s0 + $0x4c] sm:$0xf]
    %v36 = vld [vmem:[%s0 + $0x50] sm:$0xf]
    %v37 = vld [vmem:[%s0 + $0x54] sm:$0xf]
    %v38 = vld [vmem:[%s0 + $0x58] sm:$0xf]
    %v39 = vld [vmem:[%s0 + $0x5c] sm:$0xf]
    %v40 = vld [vmem:[%s0 + $0x60] sm:$0xf]
    %v41 = vld [vmem:[%s0 + $0x64] sm:$0xf]
    %v42 = vld [vmem:[%s0 + $0x68] sm:$0xf]
    %v43 = vld [vmem:[%s0 + $0x6c] sm:$0xf]
    %v44 = vld [vmem:[%s0 + $0x70] sm:$0xf]
    %v45 = vld [vmem:[%s0 + $0x74] sm:$0xf]
    %v46 = vld [vmem:[%s0 + $0x78] sm:$0xf]
    %v47 = vld [vmem:[%s0 + $0x7c] sm:$0xf]
    %v48 = vld [vmem:[%s1] sm:$0xf]
    %v49 = vld [vmem:[%s1 + $0x4] sm:$0xf]
    %v50 = vld [vmem:[%s1 + $0x8] sm:$0xf]
    %v51 = vld [vmem:[%s1 + $0xc] sm:$0xf]
    %v52 = vld [vmem:[%s1 + $0x10] sm:$0xf]
    %v53 = vld [vmem:[%s1 + $0x14] sm:$0xf]
    %v54 = vld [vmem:[%s1 + $0x18] sm:$0xf]
    %v55 = vld [vmem:[%s1 + $0x1c] sm:$0xf]
    %v56 = vld [vmem:[%s2] sm:$0x1]
    %v58 = vlaneseq
    %v59 = vshrl.u32 %v58, 7
    %v60 = vsub.s32 0, %v59
    %v61 = vrot.slane %v56, %v60
    %v95 = vunpack.c.l.b16 %v16
    %v96 = vunpack.c.l.b16 %v17
    %v97 = vunpack.c.l.b16 %v18
    %v98 = vunpack.c.l.b16 %v19
    %v99 = vunpack.c.l.b16 %v20
    %v100 = vunpack.c.l.b16 %v21
    %v101 = vunpack.c.l.b16 %v22
    %v102 = vunpack.c.l.b16 %v23
    %v103 = vunpack.c.l.b16 %v24
    %v104 = vunpack.c.l.b16 %v25
    %v105 = vunpack.c.l.b16 %v26
    %v106 = vunpack.c.l.b16 %v27
    %v107 = vunpack.c.l.b16 %v28
    %v108 = vunpack.c.l.b16 %v29
    %v109 = vunpack.c.l.b16 %v30
    %v110 = vunpack.c.l.b16 %v31
    %v111 = vunpack.c.l.b16 %v32
    %v112 = vunpack.c.l.b16 %v33
    %v113 = vunpack.c.l.b16 %v34
    %v114 = vunpack.c.l.b16 %v35
    %v115 = vunpack.c.l.b16 %v36
    %v116 = vunpack.c.l.b16 %v37
    %v117 = vunpack.c.l.b16 %v38
    %v118 = vunpack.c.l.b16 %v39
    %v119 = vunpack.c.l.b16 %v40
    %v120 = vunpack.c.l.b16 %v41
    %v121 = vunpack.c.l.b16 %v42
    %v122 = vunpack.c.l.b16 %v43
    %v123 = vunpack.c.l.b16 %v44
    %v124 = vunpack.c.l.b16 %v45
    %v125 = vunpack.c.l.b16 %v46
    %v126 = vunpack.c.l.b16 %v47
    %v127 = vpack.c.b16 %v96, %v95
    %v128 = vpack.c.b16 %v98, %v97
    %v129 = vpack.c.b16 %v100, %v99
    %v130 = vpack.c.b16 %v102, %v101
    %v131 = vpack.c.b16 %v104, %v103
    %v132 = vpack.c.b16 %v106, %v105
    %v133 = vpack.c.b16 %v108, %v107
    %v134 = vpack.c.b16 %v110, %v109
    %v135 = vpack.c.b16 %v112, %v111
    %v136 = vpack.c.b16 %v114, %v113
    %v137 = vpack.c.b16 %v116, %v115
    %v138 = vpack.c.b16 %v118, %v117
    %v139 = vpack.c.b16 %v120, %v119
    %v140 = vpack.c.b16 %v122, %v121
    %v141 = vpack.c.b16 %v124, %v123
    %v142 = vpack.c.b16 %v126, %v125
    %v151 = vunpack.c.l.b16 %v48
    %v152 = vunpack.c.l.b16 %v49
    %v153 = vunpack.c.l.b16 %v50
    %v154 = vunpack.c.l.b16 %v51
    %v155 = vunpack.c.l.b16 %v52
    %v156 = vunpack.c.l.b16 %v53
    %v157 = vunpack.c.l.b16 %v54
    %v158 = vunpack.c.l.b16 %v55
    %v159 = vpack.c.b16 %v152, %v151
    %v160 = vpack.c.b16 %v154, %v153
    %v161 = vpack.c.b16 %v156, %v155
    %v162 = vpack.c.b16 %v158, %v157
    %vm167 = vcmask 523264
    %v169 = vsel %vm167, %v127, 0
    %v172 = vsel %vm167, %v128, 0
    %v175 = vsel %vm167, %v129, 0
    %v178 = vsel %vm167, %v130, 0
    %v181 = vsel %vm167, %v131, 0
    %v184 = vsel %vm167, %v132, 0
    %v187 = vsel %vm167, %v133, 0
    %v190 = vsel %vm167, %v134, 0
    %v193 = vsel %vm167, %v135, 0
    %v196 = vsel %vm167, %v136, 0
    %v199 = vsel %vm167, %v137, 0
    %v202 = vsel %vm167, %v138, 0
    %v205 = vsel %vm167, %v139, 0
    %v208 = vsel %vm167, %v140, 0
    %v211 = vsel %vm167, %v141, 0
    %v214 = vsel %vm167, %v142, 0
    %216 = vmatprep.subr.bf16.mxu0 0
    %217 = vmatpush1.bf16.msra.mxu0 0
    %218 = vmatprep.subr.bf16.mxu0 0
    %219 = vmatpush1.bf16.msra.mxu0 0
    %220 = vmatprep.subr.bf16.mxu0 0
    %221 = vmatpush1.bf16.msra.mxu0 0
    %222 = vmatprep.subr.bf16.mxu0 0
    %223 = vmatpush1.bf16.msra.mxu0 0
    %224 = vmatprep.subr.bf16.mxu0 0
    %225 = vmatpush1.bf16.msra.mxu0 %v162
    %226 = vmatprep.subr.bf16.mxu0 0
    %227 = vmatpush1.bf16.msra.mxu0 %v161
    %228 = vmatprep.subr.bf16.mxu0 0
    %229 = vmatpush1.bf16.msra.mxu0 %v160
    %230 = vmatprep.subr.bf16.mxu0 0
    %231 = vmatpush1.bf16.msra.mxu0 %v159
    %232 = vmatprep.subr.bf16.mxu0 0
    %233 = vmatpush2.bf16.msra.mxu0 0
    %234 = vmatprep.subr.bf16.mxu0 0
    %235 = vmatpush2.bf16.msra.mxu0 0
    %236 = vmatprep.subr.bf16.mxu0 0
    %237 = vmatpush2.bf16.msra.mxu0 0
    %238 = vmatprep.subr.bf16.mxu0 0
    %239 = vmatpush2.bf16.msra.mxu0 0
    %240 = vmatprep.subr.bf16.mxu0 0
    %241 = vmatpush2.bf16.msra.mxu0 0
    %242 = vmatprep.subr.bf16.mxu0 0
    %243 = vmatpush2.bf16.msra.mxu0 0
    %244 = vmatprep.subr.bf16.mxu0 0
    %245 = vmatpush2.bf16.msra.mxu0 0
    %246 = vmatprep.subr.bf16.mxu0 0
    %247 = vmatpush2.bf16.msra.mxu0 0
    %248 = vmatprep.mubr.bf16.mxu0 0
    %249 = vmatmul.mubr.bf16.gmra.mxu0 %v169
    %v250 = vpop.f32.mrf.mxu0
    %v251 = vadd.f32 %v61, %v250
    %v252 = vpop.f32.mrf.mxu0
    %v253 = vpop.f32.mrf.mxu0
    %v254 = vadd.f32 %v61, %v253
    %v255 = vpop.f32.mrf.mxu0
    %256 = vmatprep.mubr.bf16.mxu0 0
    %257 = vmatmul.mubr.bf16.gmra.mxu0 %v172
    %v258 = vpop.f32.mrf.mxu0
    %v259 = vadd.f32 %v61, %v258
    %v260 = vpop.f32.mrf.mxu0
    %v261 = vpop.f32.mrf.mxu0
    %v262 = vadd.f32 %v61, %v261
    %v263 = vpop.f32.mrf.mxu0
    %264 = vmatprep.mubr.bf16.mxu0 0
    %265 = vmatmul.mubr.bf16.gmra.mxu0 %v175
    %v266 = vpop.f32.mrf.mxu0
    %v267 = vadd.f32 %v61, %v266
    %v268 = vpop.f32.mrf.mxu0
    %v269 = vpop.f32.mrf.mxu0
    %v270 = vadd.f32 %v61, %v269
    %v271 = vpop.f32.mrf.mxu0
    %272 = vmatprep.mubr.bf16.mxu0 0
    %273 = vmatmul.mubr.bf16.gmra.mxu0 %v178
    %v274 = vpop.f32.mrf.mxu0
    %v275 = vadd.f32 %v61, %v274
    %v276 = vpop.f32.mrf.mxu0
    %v277 = vpop.f32.mrf.mxu0
    %v278 = vadd.f32 %v61, %v277
    %v279 = vpop.f32.mrf.mxu0
    %280 = vmatprep.mubr.bf16.mxu0 0
    %281 = vmatmul.mubr.bf16.gmra.mxu0 %v181
    %v282 = vpop.f32.mrf.mxu0
    %v283 = vadd.f32 %v61, %v282
    %v284 = vpop.f32.mrf.mxu0
    %v285 = vpop.f32.mrf.mxu0
    %v286 = vadd.f32 %v61, %v285
    %v287 = vpop.f32.mrf.mxu0
    %288 = vmatprep.mubr.bf16.mxu0 0
    %289 = vmatmul.mubr.bf16.gmra.mxu0 %v184
    %v290 = vpop.f32.mrf.mxu0
    %v291 = vadd.f32 %v61, %v290
    %v292 = vpop.f32.mrf.mxu0
    %v293 = vpop.f32.mrf.mxu0
    %v294 = vadd.f32 %v61, %v293
    %v295 = vpop.f32.mrf.mxu0
    %296 = vmatprep.mubr.bf16.mxu0 0
    %297 = vmatmul.mubr.bf16.gmra.mxu0 %v187
    %v298 = vpop.f32.mrf.mxu0
    %v299 = vadd.f32 %v61, %v298
    %v300 = vpop.f32.mrf.mxu0
    %v301 = vpop.f32.mrf.mxu0
    %v302 = vadd.f32 %v61, %v301
    %v303 = vpop.f32.mrf.mxu0
    %304 = vmatprep.mubr.bf16.mxu0 0
    %305 = vmatmul.mubr.bf16.gmra.mxu0 %v190
    %v306 = vpop.f32.mrf.mxu0
    %v307 = vadd.f32 %v61, %v306
    %v308 = vpop.f32.mrf.mxu0
    %v309 = vpop.f32.mrf.mxu0
    %v310 = vadd.f32 %v61, %v309
    %v311 = vpop.f32.mrf.mxu0
    %312 = vmatprep.mubr.bf16.mxu0 0
    %313 = vmatmul.mubr.bf16.gmra.mxu0 %v193
    %v314 = vpop.f32.mrf.mxu0
    %v315 = vadd.f32 %v61, %v314
    %v316 = vpop.f32.mrf.mxu0
    %v317 = vpop.f32.mrf.mxu0
    %v318 = vadd.f32 %v61, %v317
    %v319 = vpop.f32.mrf.mxu0
    %320 = vmatprep.mubr.bf16.mxu0 0
    %321 = vmatmul.mubr.bf16.gmra.mxu0 %v196
    %v322 = vpop.f32.mrf.mxu0
    %v323 = vadd.f32 %v61, %v322
    %v324 = vpop.f32.mrf.mxu0
    %v325 = vpop.f32.mrf.mxu0
    %v326 = vadd.f32 %v61, %v325
    %v327 = vpop.f32.mrf.mxu0
    %328 = vmatprep.mubr.bf16.mxu0 0
    %329 = vmatmul.mubr.bf16.gmra.mxu0 %v199
    %v330 = vpop.f32.mrf.mxu0
    %v331 = vadd.f32 %v61, %v330
    %v332 = vpop.f32.mrf.mxu0
    %v333 = vpop.f32.mrf.mxu0
    %v334 = vadd.f32 %v61, %v333
    %v335 = vpop.f32.mrf.mxu0
    %336 = vmatprep.mubr.bf16.mxu0 0
    %337 = vmatmul.mubr.bf16.gmra.mxu0 %v202
    %v338 = vpop.f32.mrf.mxu0
    %v339 = vadd.f32 %v61, %v338
    %v340 = vpop.f32.mrf.mxu0
    %v341 = vpop.f32.mrf.mxu0
    %v342 = vadd.f32 %v61, %v341
    %v343 = vpop.f32.mrf.mxu0
    %344 = vmatprep.mubr.bf16.mxu0 0
    %345 = vmatmul.mubr.bf16.gmra.mxu0 %v205
    %v346 = vpop.f32.mrf.mxu0
    %v347 = vadd.f32 %v61, %v346
    %v348 = vpop.f32.mrf.mxu0
    %v349 = vpop.f32.mrf.mxu0
    %v350 = vadd.f32 %v61, %v349
    %v351 = vpop.f32.mrf.mxu0
    %352 = vmatprep.mubr.bf16.mxu0 0
    %353 = vmatmul.mubr.bf16.gmra.mxu0 %v208
    %v354 = vpop.f32.mrf.mxu0
    %v355 = vadd.f32 %v61, %v354
    %v356 = vpop.f32.mrf.mxu0
    %v357 = vpop.f32.mrf.mxu0
    %v358 = vadd.f32 %v61, %v357
    %v359 = vpop.f32.mrf.mxu0
    %360 = vmatprep.mubr.bf16.mxu0 0
    %361 = vmatmul.mubr.bf16.gmra.mxu0 %v211
    %v362 = vpop.f32.mrf.mxu0
    %v363 = vadd.f32 %v61, %v362
    %v364 = vpop.f32.mrf.mxu0
    %v365 = vpop.f32.mrf.mxu0
    %v366 = vadd.f32 %v61, %v365
    %v367 = vpop.f32.mrf.mxu0
    %368 = vmatprep.mubr.bf16.mxu0 0
    %369 = vmatmul.mubr.bf16.gmra.mxu0 %v214
    %v370 = vpop.f32.mrf.mxu0
    %v371 = vadd.f32 %v61, %v370
    %v372 = vpop.f32.mrf.mxu0
    %v373 = vpop.f32.mrf.mxu0
    %v374 = vadd.f32 %v61, %v373
    %v375 = vpop.f32.mrf.mxu0
    %376 = vdwg.mxu0
    %377 = vst [vmem:[#allocation2] sm:$0xff] %v251
    %378 = vst [vmem:[#allocation2 + $0x8] sm:$0xff] %v254
    %379 = vst [vmem:[#allocation2 + $0x10] sm:$0xff] %v259
    %380 = vst [vmem:[#allocation2 + $0x18] sm:$0xff] %v262
    %381 = vst [vmem:[#allocation2 + $0x20] sm:$0xff] %v267
    %382 = vst [vmem:[#allocation2 + $0x28] sm:$0xff] %v270
    %383 = vst [vmem:[#allocation2 + $0x30] sm:$0xff] %v275
    %384 = vst [vmem:[#allocation2 + $0x38] sm:$0xff] %v278
    %385 = vst [vmem:[#allocation2 + $0x40] sm:$0xff] %v283
    %386 = vst [vmem:[#allocation2 + $0x48] sm:$0xff] %v286
    %387 = vst [vmem:[#allocation2 + $0x50] sm:$0xff] %v291
    %388 = vst [vmem:[#allocation2 + $0x58] sm:$0xff] %v294
    %389 = vst [vmem:[#allocation2 + $0x60] sm:$0xff] %v299
    %390 = vst [vmem:[#allocation2 + $0x68] sm:$0xff] %v302
    %391 = vst [vmem:[#allocation2 + $0x70] sm:$0xff] %v307
    %392 = vst [vmem:[#allocation2 + $0x78] sm:$0xff] %v310
    %393 = vst [vmem:[#allocation2 + $0x80] sm:$0xff] %v315
    %394 = vst [vmem:[#allocation2 + $0x88] sm:$0xff] %v318
    %395 = vst [vmem:[#allocation2 + $0x90] sm:$0xff] %v323
    %396 = vst [vmem:[#allocation2 + $0x98] sm:$0xff] %v326
    %397 = vst [vmem:[#allocation2 + $0xa0] sm:$0xff] %v331
    %398 = vst [vmem:[#allocation2 + $0xa8] sm:$0xff] %v334
    %399 = vst [vmem:[#allocation2 + $0xb0] sm:$0xff] %v339
    %400 = vst [vmem:[#allocation2 + $0xb8] sm:$0xff] %v342
    %401 = vst [vmem:[#allocation2 + $0xc0] sm:$0xff] %v347
    %402 = vst [vmem:[#allocation2 + $0xc8] sm:$0xff] %v350
    %403 = vst [vmem:[#allocation2 + $0xd0] sm:$0xff] %v355
    %404 = vst [vmem:[#allocation2 + $0xd8] sm:$0xff] %v358
    %405 = vst [vmem:[#allocation2 + $0xe0] sm:$0xff] %v363
    %406 = vst [vmem:[#allocation2 + $0xe8] sm:$0xff] %v366
    %407 = vst [vmem:[#allocation2 + $0xf0] sm:$0xff] %v371
    %408 = vst [vmem:[#allocation2 + $0xf8] sm:$0xff] %v374
    // Predicated region
    $region14: #{tpu_custom_call.1} parent=1 // pred_check
      _
    $region15: #{tpu_custom_call.1} parent=1 // pred_check_branch
      %410 = sbr.rel (0) target = $region17
    $region16: #{tpu_custom_call.1} parent=1 // pred_region
      %s412 = ssub.s32 4096, 4096
      %413 = vsyncadd [#allocation3], %s412
      %s414 = sshll.u32 [#allocation2], 4
      %s415 = int_to_ptr.vmem [resolvable:$true] %s414
      %420 = dma.vmem_to_hbm [thread:$0]  %s415, 4096, %s3, [#allocation3], 128, 128, 8
    $region17: #{tpu_custom_call.1} parent=1 // pred_fallthru
      _
    // Predicated region
    $region18: #{tpu_custom_call.1} parent=1 // pred_check
      _
    $region19: #{tpu_custom_call.1} parent=1 // pred_check_branch
      %422 = sbr.rel (0) target = $region21
    $region20: #{tpu_custom_call.1} parent=1 // pred_region
      %423 = dma.done [#allocation3], 4096
    $region21: #{tpu_custom_call.1} parent=1 // pred_fallthru
      _
    %424 = vsyncpa [#allocation3], 1

// kernel: tpu_custom_call.1
$region0: #{tpu_custom_call.1}
  #allocation0 [shape = 'u32[]', space=smem, size = 0x4, offset = 0x4, fixed_abs, tag = 'smem constant byte address 0x4 - core index']
  #allocation1 [shape = 'u32[144,128]{1,0:T(1,128)}', space=vmem, size = 0x12000, scoped, tag = 'internal scratch']
  %s0 = inlined_call_operand.vmem [shape: bf16[256,64], index: 0, kind: input, shape index: {}]
  %s1 = inlined_call_operand.vmem [shape: bf16[64,128], index: 1, kind: input, shape index: {}]
  %s2 = inlined_call_operand.vmem [shape: f32[1,128], index: 2, kind: input, shape index: {}]
  %s3 = inlined_call_operand.hbm [shape: f32[256,128], index: 3, kind: output, shape index: {}]
  %s4 = sld [smem:[#allocation0]]
  $region22: #{tpu_custom_call.1} parent=0
    _
  %s6 = ssub.s32 1, %s4
  %s7 = scalar_select 0, %s6, %s4
  $region1: #{tpu_custom_call.1} parent=0
    #allocation2 [shape = 'u8[131072]{0}', space=vmem, size = 0x20000, scoped, tag = 'output window, operand 0, single buffered']
    #allocation3 [shape = 's32[1]{0}', space=sflag, size = 0x4, scoped, tag = 'scoped memory for tpu_custom_call.1']
    %8 = vsyncpa [#allocation3], 0
    // Predicated region
    $region2: #{tpu_custom_call.1} parent=1 // pred_check
      _
    $region3: #{tpu_custom_call.1} parent=1 // pred_check_branch
      %10 = sbr.rel (0) target = $region5
    $region4: #{tpu_custom_call.1} parent=1 // pred_region
      _
    $region5: #{tpu_custom_call.1} parent=1 // pred_fallthru
      _
    // Predicated region
    $region6: #{tpu_custom_call.1} parent=1 // pred_check
      _
    $region7: #{tpu_custom_call.1} parent=1 // pred_check_branch
      %12 = sbr.rel (0) target = $region9
    $region8: #{tpu_custom_call.1} parent=1 // pred_region
      _
    $region9: #{tpu_custom_call.1} parent=1 // pred_fallthru
      _
    // Predicated region
    $region10: #{tpu_custom_call.1} parent=1 // pred_check
      _
    $region11: #{tpu_custom_call.1} parent=1 // pred_check_branch
      %14 = sbr.rel (0) target = $region13
    $region12: #{tpu_custom_call.1} parent=1 // pred_region
      _
    $region13: #{tpu_custom_call.1} parent=1 // pred_fallthru
      _
    %v16 = vld [vmem:[%s0] sm:$0xf]
    %v17 = vld [vmem:[%s0 + $0x4] sm:$0xf]
    %v18 = vld [vmem:[%s0 + $0x8] sm:$0xf]
    %v19 = vld [vmem:[%s0 + $0xc] sm:$0xf]
    %v20 = vld [vmem:[%s0 + $0x10] sm:$0xf]
    %v21 = vld [vmem:[%s0 + $0x14] sm:$0xf]
    %v22 = vld [vmem:[%s0 + $0x18] sm:$0xf]
    %v23 = vld [vmem:[%s0 + $0x1c] sm:$0xf]
    %v24 = vld [vmem:[%s0 + $0x20] sm:$0xf]
    %v25 = vld [vmem:[%s0 + $0x24] sm:$0xf]
    %v26 = vld [vmem:[%s0 + $0x28] sm:$0xf]
    %v27 = vld [vmem:[%s0 + $0x2c] sm:$0xf]
    %v28 = vld [vmem:[%s0 + $0x30] sm:$0xf]
    %v29 = vld [vmem:[%s0 + $0x34] sm:$0xf]
    %v30 = vld [vmem:[%s0 + $0x38] sm:$0xf]
    %v31 = vld [vmem:[%s0 + $0x3c] sm:$0xf]
    %v32 = vld [vmem:[%s0 + $0x40] sm:$0xf]
    %v33 = vld [vmem:[%s0 + $0x44] sm:$0xf]
    %v34 = vld [vmem:[%s0 + $0x48] sm:$0xf]
    %v35 = vld [vmem:[%s0 + $0x4c] sm:$0xf]
    %v36 = vld [vmem:[%s0 + $0x50] sm:$0xf]
    %v37 = vld [vmem:[%s0 + $0x54] sm:$0xf]
    %v38 = vld [vmem:[%s0 + $0x58] sm:$0xf]
    %v39 = vld [vmem:[%s0 + $0x5c] sm:$0xf]
    %v40 = vld [vmem:[%s0 + $0x60] sm:$0xf]
    %v41 = vld [vmem:[%s0 + $0x64] sm:$0xf]
    %v42 = vld [vmem:[%s0 + $0x68] sm:$0xf]
    %v43 = vld [vmem:[%s0 + $0x6c] sm:$0xf]
    %v44 = vld [vmem:[%s0 + $0x70] sm:$0xf]
    %v45 = vld [vmem:[%s0 + $0x74] sm:$0xf]
    %v46 = vld [vmem:[%s0 + $0x78] sm:$0xf]
    %v47 = vld [vmem:[%s0 + $0x7c] sm:$0xf]
    %v48 = vld [vmem:[%s1] sm:$0xf]
    %v49 = vld [vmem:[%s1 + $0x4] sm:$0xf]
    %v50 = vld [vmem:[%s1 + $0x8] sm:$0xf]
    %v51 = vld [vmem:[%s1 + $0xc] sm:$0xf]
    %v52 = vld [vmem:[%s1 + $0x10] sm:$0xf]
    %v53 = vld [vmem:[%s1 + $0x14] sm:$0xf]
    %v54 = vld [vmem:[%s1 + $0x18] sm:$0xf]
    %v55 = vld [vmem:[%s1 + $0x1c] sm:$0xf]
    %v56 = vld [vmem:[%s2] sm:$0x1]
    %v58 = vlaneseq
    %v59 = vshrl.u32 %v58, 7
    %v60 = vsub.s32 0, %v59
    %v61 = vrot.slane %v56, %v60
    %v95 = vunpack.c.l.b16 %v16
    %v96 = vunpack.c.l.b16 %v17
    %v97 = vunpack.c.l.b16 %v18
    %v98 = vunpack.c.l.b16 %v19
    %v99 = vunpack.c.l.b16 %v20
    %v100 = vunpack.c.l.b16 %v21
    %v101 = vunpack.c.l.b16 %v22
    %v102 = vunpack.c.l.b16 %v23
    %v103 = vunpack.c.l.b16 %v24
    %v104 = vunpack.c.l.b16 %v25
    %v105 = vunpack.c.l.b16 %v26
    %v106 = vunpack.c.l.b16 %v27
    %v107 = vunpack.c.l.b16 %v28
    %v108 = vunpack.c.l.b16 %v29
    %v109 = vunpack.c.l.b16 %v30
    %v110 = vunpack.c.l.b16 %v31
    %v111 = vunpack.c.l.b16 %v32
    %v112 = vunpack.c.l.b16 %v33
    %v113 = vunpack.c.l.b16 %v34
    %v114 = vunpack.c.l.b16 %v35
    %v115 = vunpack.c.l.b16 %v36
    %v116 = vunpack.c.l.b16 %v37
    %v117 = vunpack.c.l.b16 %v38
    %v118 = vunpack.c.l.b16 %v39
    %v119 = vunpack.c.l.b16 %v40
    %v120 = vunpack.c.l.b16 %v41
    %v121 = vunpack.c.l.b16 %v42
    %v122 = vunpack.c.l.b16 %v43
    %v123 = vunpack.c.l.b16 %v44
    %v124 = vunpack.c.l.b16 %v45
    %v125 = vunpack.c.l.b16 %v46
    %v126 = vunpack.c.l.b16 %v47
    %v127 = vpack.c.b16 %v96, %v95
    %v128 = vpack.c.b16 %v98, %v97
    %v129 = vpack.c.b16 %v100, %v99
    %v130 = vpack.c.b16 %v102, %v101
    %v131 = vpack.c.b16 %v104, %v103
    %v132 = vpack.c.b16 %v106, %v105
    %v133 = vpack.c.b16 %v108, %v107
    %v134 = vpack.c.b16 %v110, %v109
    %v135 = vpack.c.b16 %v112, %v111
    %v136 = vpack.c.b16 %v114, %v113
    %v137 = vpack.c.b16 %v116, %v115
    %v138 = vpack.c.b16 %v118, %v117
    %v139 = vpack.c.b16 %v120, %v119
    %v140 = vpack.c.b16 %v122, %v121
    %v141 = vpack.c.b16 %v124, %v123
    %v142 = vpack.c.b16 %v126, %v125
    %v151 = vunpack.c.l.b16 %v48
    %v152 = vunpack.c.l.b16 %v49
    %v153 = vunpack.c.l.b16 %v50
    %v154 = vunpack.c.l.b16 %v51
    %v155 = vunpack.c.l.b16 %v52
    %v156 = vunpack.c.l.b16 %v53
    %v157 = vunpack.c.l.b16 %v54
    %v158 = vunpack.c.l.b16 %v55
    %v159 = vpack.c.b16 %v152, %v151
    %v160 = vpack.c.b16 %v154, %v153
    %v161 = vpack.c.b16 %v156, %v155
    %v162 = vpack.c.b16 %v158, %v157
    %vm167 = vcmask 523264
    %v169 = vsel %vm167, %v127, 0
    %v172 = vsel %vm167, %v128, 0
    %v175 = vsel %vm167, %v129, 0
    %v178 = vsel %vm167, %v130, 0
    %v181 = vsel %vm167, %v131, 0
    %v184 = vsel %vm167, %v132, 0
    %v187 = vsel %vm167, %v133, 0
    %v190 = vsel %vm167, %v134, 0
    %v193 = vsel %vm167, %v135, 0
    %v196 = vsel %vm167, %v136, 0
    %v199 = vsel %vm167, %v137, 0
    %v202 = vsel %vm167, %v138, 0
    %v205 = vsel %vm167, %v139, 0
    %v208 = vsel %vm167, %v140, 0
    %v211 = vsel %vm167, %v141, 0
    %v214 = vsel %vm167, %v142, 0
    %216 = vmatprep.subr.bf16.mxu0 0
    %217 = vmatpush1.bf16.msra.mxu0 0
    %218 = vmatprep.subr.bf16.mxu0 0
    %219 = vmatpush1.bf16.msra.mxu0 0
    %220 = vmatprep.subr.bf16.mxu0 0
    %221 = vmatpush1.bf16.msra.mxu0 0
    %222 = vmatprep.subr.bf16.mxu0 0
    %223 = vmatpush1.bf16.msra.mxu0 0
    %224 = vmatprep.subr.bf16.mxu0 0
    %225 = vmatpush1.bf16.msra.mxu0 %v162
    %226 = vmatprep.subr.bf16.mxu0 0
    %227 = vmatpush1.bf16.msra.mxu0 %v161
    %228 = vmatprep.subr.bf16.mxu0 0
    %229 = vmatpush1.bf16.msra.mxu0 %v160
    %230 = vmatprep.subr.bf16.mxu0 0
    %231 = vmatpush1.bf16.msra.mxu0 %v159
    %232 = vmatprep.subr.bf16.mxu0 0
    %233 = vmatpush2.bf16.msra.mxu0 0
    %234 = vmatprep.subr.bf16.mxu0 0
    %235 = vmatpush2.bf16.msra.mxu0 0
    %236 = vmatprep.subr.bf16.mxu0 0
    %237 = vmatpush2.bf16.msra.mxu0 0
    %238 = vmatprep.subr.bf16.mxu0 0
    %239 = vmatpush2.bf16.msra.mxu0 0
    %240 = vmatprep.subr.bf16.mxu0 0
    %241 = vmatpush2.bf16.msra.mxu0 0
    %242 = vmatprep.subr.bf16.mxu0 0
    %243 = vmatpush2.bf16.msra.mxu0 0
    %244 = vmatprep.subr.bf16.mxu0 0
    %245 = vmatpush2.bf16.msra.mxu0 0
    %246 = vmatprep.subr.bf16.mxu0 0
    %247 = vmatpush2.bf16.msra.mxu0 0
    %248 = vmatprep.mubr.bf16.mxu0 0
    %249 = vmatmul.mubr.bf16.gmra.mxu0 %v169
    %v250 = vpop.f32.mrf.mxu0
    %v251 = vadd.f32 %v61, %v250
    %v252 = vpop.f32.mrf.mxu0
    %v253 = vpop.f32.mrf.mxu0
    %v254 = vadd.f32 %v61, %v253
    %v255 = vpop.f32.mrf.mxu0
    %256 = vmatprep.mubr.bf16.mxu0 0
    %257 = vmatmul.mubr.bf16.gmra.mxu0 %v172
    %v258 = vpop.f32.mrf.mxu0
    %v259 = vadd.f32 %v61, %v258
    %v260 = vpop.f32.mrf.mxu0
    %v261 = vpop.f32.mrf.mxu0
    %v262 = vadd.f32 %v61, %v261
    %v263 = vpop.f32.mrf.mxu0
    %264 = vmatprep.mubr.bf16.mxu0 0
    %265 = vmatmul.mubr.bf16.gmra.mxu0 %v175
    %v266 = vpop.f32.mrf.mxu0
    %v267 = vadd.f32 %v61, %v266
    %v268 = vpop.f32.mrf.mxu0
    %v269 = vpop.f32.mrf.mxu0
    %v270 = vadd.f32 %v61, %v269
    %v271 = vpop.f32.mrf.mxu0
    %272 = vmatprep.mubr.bf16.mxu0 0
    %273 = vmatmul.mubr.bf16.gmra.mxu0 %v178
    %v274 = vpop.f32.mrf.mxu0
    %v275 = vadd.f32 %v61, %v274
    %v276 = vpop.f32.mrf.mxu0
    %v277 = vpop.f32.mrf.mxu0
    %v278 = vadd.f32 %v61, %v277
    %v279 = vpop.f32.mrf.mxu0
    %280 = vmatprep.mubr.bf16.mxu0 0
    %281 = vmatmul.mubr.bf16.gmra.mxu0 %v181
    %v282 = vpop.f32.mrf.mxu0
    %v283 = vadd.f32 %v61, %v282
    %v284 = vpop.f32.mrf.mxu0
    %v285 = vpop.f32.mrf.mxu0
    %v286 = vadd.f32 %v61, %v285
    %v287 = vpop.f32.mrf.mxu0
    %288 = vmatprep.mubr.bf16.mxu0 0
    %289 = vmatmul.mubr.bf16.gmra.mxu0 %v184
    %v290 = vpop.f32.mrf.mxu0
    %v291 = vadd.f32 %v61, %v290
    %v292 = vpop.f32.mrf.mxu0
    %v293 = vpop.f32.mrf.mxu0
    %v294 = vadd.f32 %v61, %v293
    %v295 = vpop.f32.mrf.mxu0
    %296 = vmatprep.mubr.bf16.mxu0 0
    %297 = vmatmul.mubr.bf16.gmra.mxu0 %v187
    %v298 = vpop.f32.mrf.mxu0
    %v299 = vadd.f32 %v61, %v298
    %v300 = vpop.f32.mrf.mxu0
    %v301 = vpop.f32.mrf.mxu0
    %v302 = vadd.f32 %v61, %v301
    %v303 = vpop.f32.mrf.mxu0
    %304 = vmatprep.mubr.bf16.mxu0 0
    %305 = vmatmul.mubr.bf16.gmra.mxu0 %v190
    %v306 = vpop.f32.mrf.mxu0
    %v307 = vadd.f32 %v61, %v306
    %v308 = vpop.f32.mrf.mxu0
    %v309 = vpop.f32.mrf.mxu0
    %v310 = vadd.f32 %v61, %v309
    %v311 = vpop.f32.mrf.mxu0
    %312 = vmatprep.mubr.bf16.mxu0 0
    %313 = vmatmul.mubr.bf16.gmra.mxu0 %v193
    %v314 = vpop.f32.mrf.mxu0
    %v315 = vadd.f32 %v61, %v314
    %v316 = vpop.f32.mrf.mxu0
    %v317 = vpop.f32.mrf.mxu0
    %v318 = vadd.f32 %v61, %v317
    %v319 = vpop.f32.mrf.mxu0
    %320 = vmatprep.mubr.bf16.mxu0 0
    %321 = vmatmul.mubr.bf16.gmra.mxu0 %v196
    %v322 = vpop.f32.mrf.mxu0
    %v323 = vadd.f32 %v61, %v322
    %v324 = vpop.f32.mrf.mxu0
    %v325 = vpop.f32.mrf.mxu0
    %v326 = vadd.f32 %v61, %v325
    %v327 = vpop.f32.mrf.mxu0
    %328 = vmatprep.mubr.bf16.mxu0 0
    %329 = vmatmul.mubr.bf16.gmra.mxu0 %v199
    %v330 = vpop.f32.mrf.mxu0
    %v331 = vadd.f32 %v61, %v330
    %v332 = vpop.f32.mrf.mxu0
    %v333 = vpop.f32.mrf.mxu0
    %v334 = vadd.f32 %v61, %v333
    %v335 = vpop.f32.mrf.mxu0
    %336 = vmatprep.mubr.bf16.mxu0 0
    %337 = vmatmul.mubr.bf16.gmra.mxu0 %v202
    %v338 = vpop.f32.mrf.mxu0
    %v339 = vadd.f32 %v61, %v338
    %v340 = vpop.f32.mrf.mxu0
    %v341 = vpop.f32.mrf.mxu0
    %v342 = vadd.f32 %v61, %v341
    %v343 = vpop.f32.mrf.mxu0
    %344 = vmatprep.mubr.bf16.mxu0 0
    %345 = vmatmul.mubr.bf16.gmra.mxu0 %v205
    %v346 = vpop.f32.mrf.mxu0
    %v347 = vadd.f32 %v61, %v346
    %v348 = vpop.f32.mrf.mxu0
    %v349 = vpop.f32.mrf.mxu0
    %v350 = vadd.f32 %v61, %v349
    %v351 = vpop.f32.mrf.mxu0
    %352 = vmatprep.mubr.bf16.mxu0 0
    %353 = vmatmul.mubr.bf16.gmra.mxu0 %v208
    %v354 = vpop.f32.mrf.mxu0
    %v355 = vadd.f32 %v61, %v354
    %v356 = vpop.f32.mrf.mxu0
    %v357 = vpop.f32.mrf.mxu0
    %v358 = vadd.f32 %v61, %v357
    %v359 = vpop.f32.mrf.mxu0
    %360 = vmatprep.mubr.bf16.mxu0 0
    %361 = vmatmul.mubr.bf16.gmra.mxu0 %v211
    %v362 = vpop.f32.mrf.mxu0
    %v363 = vadd.f32 %v61, %v362
    %v364 = vpop.f32.mrf.mxu0
    %v365 = vpop.f32.mrf.mxu0
    %v366 = vadd.f32 %v61, %v365
    %v367 = vpop.f32.mrf.mxu0
    %368 = vmatprep.mubr.bf16.mxu0 0
    %369 = vmatmul.mubr.bf16.gmra.mxu0 %v214
    %v370 = vpop.f32.mrf.mxu0
    %v371 = vadd.f32 %v61, %v370
    %v372 = vpop.f32.mrf.mxu0
    %v373 = vpop.f32.mrf.mxu0
    %v374 = vadd.f32 %v61, %v373
    %v375 = vpop.f32.mrf.mxu0
    %376 = vdwg.mxu0
    %377 = vst [vmem:[#allocation2] sm:$0xff] %v251
    %378 = vst [vmem:[#allocation2 + $0x8] sm:$0xff] %v254
    %379 = vst [vmem:[#allocation2 + $0x10] sm:$0xff] %v259
    %380 = vst [vmem:[#allocation2 + $0x18] sm:$0xff] %v262
    %381 = vst [vmem:[#allocation2 + $0x20] sm:$0xff] %v267
    %382 = vst [vmem:[#allocation2 + $0x28] sm:$0xff] %v270
    %383 = vst [vmem:[#allocation2 + $0x30] sm:$0xff] %v275
    %384 = vst [vmem:[#allocation2 + $0x38] sm:$0xff] %v278
    %385 = vst [vmem:[#allocation2 + $0x40] sm:$0xff] %v283
    %386 = vst [vmem:[#allocation2 + $0x48] sm:$0xff] %v286
    %387 = vst [vmem:[#allocation2 + $0x50] sm:$0xff] %v291
    %388 = vst [vmem:[#allocation2 + $0x58] sm:$0xff] %v294
    %389 = vst [vmem:[#allocation2 + $0x60] sm:$0xff] %v299
    %390 = vst [vmem:[#allocation2 + $0x68] sm:$0xff] %v302
    %391 = vst [vmem:[#allocation2 + $0x70] sm:$0xff] %v307
    %392 = vst [vmem:[#allocation2 + $0x78] sm:$0xff] %v310
    %393 = vst [vmem:[#allocation2 + $0x80] sm:$0xff] %v315
    %394 = vst [vmem:[#allocation2 + $0x88] sm:$0xff] %v318
    %395 = vst [vmem:[#allocation2 + $0x90] sm:$0xff] %v323
    %396 = vst [vmem:[#allocation2 + $0x98] sm:$0xff] %v326
    %397 = vst [vmem:[#allocation2 + $0xa0] sm:$0xff] %v331
    %398 = vst [vmem:[#allocation2 + $0xa8] sm:$0xff] %v334
    %399 = vst [vmem:[#allocation2 + $0xb0] sm:$0xff] %v339
    %400 = vst [vmem:[#allocation2 + $0xb8] sm:$0xff] %v342
    %401 = vst [vmem:[#allocation2 + $0xc0] sm:$0xff] %v347
    %402 = vst [vmem:[#allocation2 + $0xc8] sm:$0xff] %v350
    %403 = vst [vmem:[#allocation2 + $0xd0] sm:$0xff] %v355
    %404 = vst [vmem:[#allocation2 + $0xd8] sm:$0xff] %v358
    %405 = vst [vmem:[#allocation2 + $0xe0] sm:$0xff] %v363
    %406 = vst [vmem:[#allocation2 + $0xe8] sm:$0xff] %v366
    %407 = vst [vmem:[#allocation2 + $0xf0] sm:$0xff] %v371
    %408 = vst [vmem:[#allocation2 + $0xf8] sm:$0xff] %v374
    // Predicated region
    $region14: #{tpu_custom_call.1} parent=1 // pred_check
      _
    $region15: #{tpu_custom_call.1} parent=1 // pred_check_branch
      %410 = sbr.rel (0) target = $region17
    $region16: #{tpu_custom_call.1} parent=1 // pred_region
      %s412 = ssub.s32 4096, 4096
      %413 = vsyncadd [#allocation3], %s412
      %s414 = sshll.u32 [#allocation2], 4
      %s415 = int_to_ptr.vmem [resolvable:$true] %s414
      %420 = dma.vmem_to_hbm [thread:$0]  %s415, 4096, %s3, [#allocation3], 128, 128, 8
    $region17: #{tpu_custom_call.1} parent=1 // pred_fallthru
      _
    // Predicated region
    $region18: #{tpu_custom_call.1} parent=1 // pred_check
      _
    $region19: #{tpu_custom_call.1} parent=1 // pred_check_branch
      %422 = sbr.rel (0) target = $region21
    $region20: #{tpu_custom_call.1} parent=1 // pred_region
      %423 = dma.done [#allocation3], 4096
    $region21: #{tpu_custom_call.1} parent=1 // pred_fallthru
      _
    %424 = vsyncpa [#allocation3], 1

</llo_original>
